<compile_context>
chip_gen: v5e
topology: v5e:2x2
jax: 0.10.0
libtpu: 0.0.40
codegen_flags: <defaults>
</compile_context>

<pallas_src>
import functools
import math

import numpy as np
import jax
import jax.numpy as jnp
from jax.experimental import pallas as pl
from jax.experimental.pallas import tpu as pltpu

# The reference module uses float32 machine eps (np.finfo('float32').eps).
_F32_EPS = float(np.finfo("float32").eps)

_LANE = 128
_BLOCK_BYTES = 8 * 1024 * 1024     # per-input-block budget (double-buffered by Pallas)


def _nce_partial_kernel(x_ref, o_ref, *, c: float, log_kn: float,
                        n_rows: int, tb: int, has_ragged_tail: bool):
    """Per-row-tile partial of the NCE log-likelihood sum (lane-dense output)."""
    pid = pl.program_id(0)
    x = x_ref[...].astype(jnp.float32)              # (tb, N)  N = K+1 (ragged OK)
    cf = jnp.float32(c)
    lk = jnp.float32(log_kn)

    def _store(partial):
        # Single lane-dense (1,1,128) unmasked vector store per tile.
        o_ref[...] = jnp.broadcast_to(partial, o_ref.shape)

    def _full_tile():
        # Hot path: add-c (VALU), log (EUP), subtract-from-const (VALU), VALU
        # accumulate + one small per-tile reduce. No masks, no iota.
        t = lk - jnp.log(x + cf)                    # (tb, N) per-element log-ratio
        pos = jnp.log(x[:, :1]) - lk                # (tb, 1) data-column correction
        _store(jnp.sum(t) + jnp.sum(pos))

    if not has_ragged_tail:
        _full_tile()
    else:
        last = pl.num_programs(0) - 1

        @pl.when(pid != last)
        def _():
            _full_tile()

        @pl.when(pid == last)
        def _():
            # Last tile only: out-of-bounds rows hold unspecified data, so mask
            # with a select (NaN/Inf from log(garbage) cannot leak into the sum).
            row = jax.lax.broadcasted_iota(jnp.int32, (tb, 1), 0) + pid * tb
            rvalid = row < n_rows                   # (tb, 1)
            t = jnp.where(rvalid, lk - jnp.log(x + cf), 0.0)
            pos = jnp.where(rvalid, jnp.log(x[:, :1]) - lk, 0.0)
            _store(jnp.sum(t) + jnp.sum(pos))


@functools.partial(jax.jit, static_argnums=(2,))
def nce_criterion(x: jax.Array, targets: jax.Array, n_lem: int) -> jax.Array:
    """Pallas implementation of NCECriterion.forward (targets unused, as in ref)."""
    del targets
    B, N = x.shape
    K = N - 1
    Pn = 1.0 / float(n_lem)
    k_noise = K * Pn                                 # K * Pns == K * Pnt
    c = k_noise + _F32_EPS
    log_kn = math.log(k_noise) if K > 0 else 0.0     # unused weight when K == 0

    itemsize = int(jnp.dtype(x.dtype).itemsize)
    n_lane = pl.cdiv(N, _LANE) * _LANE               # VMEM lane footprint of a row
    row_align = 8 * max(1, 4 // itemsize)            # 8 (f32) / 16 (bf16) / 32 (i8)

    # Row tile: as many rows as fit the block budget (no artificial row cap).
    rows_fit = max(row_align, (_BLOCK_BYTES // (n_lane * itemsize))
                   // row_align * row_align)
    tb_cap = rows_fit
    if B >= 2 * row_align:
        # Keep >= 2 grid steps: both v7x TensorCores get work + DMA/compute overlap.
        tb_cap = min(tb_cap, pl.cdiv(pl.cdiv(B, 2), row_align) * row_align)
    if tb_cap >= B:
        tb = B                                       # single full tile, no tail mask
    else:
        tb = tb_cap                                  # multiple of row_align
    grid = pl.cdiv(B, tb)
    has_ragged_tail = (B % tb) != 0

    # Scoped-VMEM limit: enough for the double-buffered input block everywhere
    # (v5e's default is only 16 MiB), capped well under v7x's 64 MiB physical.
    block_bytes = tb * n_lane * itemsize
    vmem_limit = int(min(max(2 * block_bytes + (2 << 20), 16 << 20), 48 << 20))

    kernel = functools.partial(_nce_partial_kernel, c=c, log_kn=log_kn,
                               n_rows=B, tb=tb, has_ragged_tail=has_ragged_tail)
    partials = pl.pallas_call(
        kernel,
        out_shape=jax.ShapeDtypeStruct((grid, 1, _LANE), jnp.float32),
        grid=(grid,),
        # Last block dim equals the full (possibly ragged) N: no padding copy,
        # x streams straight from HBM.
        in_specs=[pl.BlockSpec((tb, N), lambda i: (i, 0))],
        out_specs=pl.BlockSpec((1, 1, _LANE), lambda i: (i, 0, 0)),
        compiler_params=pltpu.CompilerParams(
            dimension_semantics=("parallel",),
            vmem_limit_bytes=vmem_limit),
    )(x)

    total = jnp.sum(partials[:, 0, 0])
    loss = -total / jnp.float32(B)
    # PyTorch returns a shape-(1,) tensor.
    return loss.reshape((1,))


def _reference(x: np.ndarray, n_lem: int) -> np.ndarray:
    """NumPy port of the PyTorch forward for verification."""
    B, N = x.shape
    K = N - 1
    Pnt = Pns = 1.0 / float(n_lem)
    eps = _F32_EPS
    Pmt = x[:, 0]
    lnPmt = np.log(Pmt / (Pmt + K * Pnt + eps))
    Pon_div = x[:, 1:] + K * Pns + eps
    lnPon = np.log((K * Pns) / Pon_div)
    return np.asarray([-(lnPmt.sum() + lnPon.sum()) / B], dtype=np.float32)


if __name__ == "__main__":
    n_lem = 1000
    batch, ncols = 8, 33                      # x: (batch, K+1) with K = 32

    key = jax.random.PRNGKey(0)
    # NCE scores are positive probability-like values.
    x = jax.random.uniform(key, (batch, ncols), dtype=jnp.float32,
                           minval=1e-4, maxval=1.0)
    targets = jnp.zeros((batch,), dtype=jnp.int32)   # unused, as in reference

    loss = jax.block_until_ready(nce_criterion(x, targets, n_lem))

    ref = _reference(np.asarray(x), n_lem)
    np.testing.assert_allclose(np.asarray(loss), ref, rtol=1e-5, atol=1e-5)

    # Also exercise the multi-tile + ragged-last-tile path on a larger shape.
    x2 = jax.random.uniform(jax.random.PRNGKey(1), (1037, 257),
                            dtype=jnp.float32, minval=1e-4, maxval=1.0)
    loss2 = jax.block_until_ready(
        nce_criterion(x2, jnp.zeros((1037,), jnp.int32), n_lem))
    np.testing.assert_allclose(np.asarray(loss2), _reference(np.asarray(x2), n_lem),
                               rtol=1e-4, atol=1e-4)

    print("KERNEL_OK")
</pallas_src>

<mosaic_0001>
module attributes {stable_mosaic.version = 11 : i64} {
  func.func @_nce_partial_kernel(%arg0: i32, %arg1: memref<8x33xf32, #tpu.memory_space<vmem>>, %arg2: memref<1x1x128xf32, #tpu.memory_space<vmem>>) attributes {dimension_semantics = [#tpu.dimension_semantics<parallel>], iteration_bounds = array<i64: 1>, scalar_prefetch = 0 : i64, scratch_operands = 0 : i64, tpu.core_type = #tpu.core_type<tc>, window_params = [{transform_indices = @transform_0, window_bounds = array<i64: 8, 33>}, {transform_indices = @transform_1, window_bounds = array<i64: 1, 1, 128>}]} {
    %c0 = arith.constant 0 : index
    %c0_0 = arith.constant 0 : index
    %0 = vector.load %arg1[%c0, %c0_0] : memref<8x33xf32, #tpu.memory_space<vmem>>, vector<8x33xf32>
    %cst = arith.constant 0.0320001207 : f32
    %1 = vector.broadcast %cst : f32 to vector<8x33xf32>
    %2 = arith.addf %0, %1 : vector<8x33xf32>
    %3 = math.log %2 : vector<8x33xf32>
    %cst_1 = arith.constant -3.44201946 : f32
    %4 = vector.broadcast %cst_1 : f32 to vector<8x33xf32>
    %5 = arith.subf %4, %3 : vector<8x33xf32>
    %6 = vector.extract_strided_slice %0 {offsets = [0, 0], sizes = [8, 1], strides = [1, 1]} : vector<8x33xf32> to vector<8x1xf32>
    %7 = math.log %6 : vector<8x1xf32>
    %cst_2 = arith.constant -3.44201946 : f32
    %8 = vector.broadcast %cst_2 : f32 to vector<8x1xf32>
    %9 = arith.subf %7, %8 : vector<8x1xf32>
    %10 = vector.shape_cast %5 : vector<8x33xf32> to vector<1x8x33xf32>
    %cst_3 = arith.constant dense<0.000000e+00> : vector<1xf32>
    %11 = vector.multi_reduction <add>, %10, %cst_3 [1, 2] : vector<1x8x33xf32> to vector<1xf32>
    %12 = vector.shape_cast %11 : vector<1xf32> to vector<1x1x1xf32>
    %13 = vector.extract %12[0, 0, 0] : f32 from vector<1x1x1xf32>
    %14 = vector.shape_cast %9 : vector<8x1xf32> to vector<1x8x1xf32>
    %cst_4 = arith.constant dense<0.000000e+00> : vector<1xf32>
    %15 = vector.multi_reduction <add>, %14, %cst_4 [1, 2] : vector<1x8x1xf32> to vector<1xf32>
    %16 = vector.shape_cast %15 : vector<1xf32> to vector<1x1x1xf32>
    %17 = vector.extract %16[0, 0, 0] : f32 from vector<1x1x1xf32>
    %18 = arith.addf %13, %17 : f32
    %19 = vector.broadcast %18 : f32 to vector<1x1x128xf32>
    %c0_5 = arith.constant 0 : index
    %c0_6 = arith.constant 0 : index
    %c0_7 = arith.constant 0 : index
    %20 = vector.load %arg2[%c0_5, %c0_6, %c0_7] : memref<1x1x128xf32, #tpu.memory_space<vmem>>, vector<1x1x128xf32>
    tpu.vector_store %arg2[%c0_5, %c0_6, %c0_7], %19 {strides = array<i32>} : memref<1x1x128xf32, #tpu.memory_space<vmem>>, vector<1x1x128xf32>,
    return
  }
  func.func @transform_0(%arg0: i32) -> (i32, i32) {
    %c0_i32 = arith.constant 0 : i32
    %c0_i32_0 = arith.constant 0 : i32
    return %arg0, %c0_i32 : i32, i32
  }
  func.func @transform_1(%arg0: i32) -> (i32, i32, i32) {
    %c0_i32 = arith.constant 0 : i32
    %c0_i32_0 = arith.constant 0 : i32
    %c0_i32_1 = arith.constant 0 : i32
    return %arg0, %c0_i32, %c0_i32_0 : i32, i32, i32
  }
}

</mosaic_0001>

<llo_original>
// kernel: nce_criterion.1
$region0: #{nce_criterion.1}
  #allocation0 [shape = 'u32[]', space=smem, size = 0x4, offset = 0x4, fixed_abs, tag = 'smem constant byte address 0x4 - core index']
  #allocation1 [shape = 'u32[72,128]{1,0:T(1,128)}', space=vmem, size = 0x9000, scoped, tag = 'internal scratch']
  %s0 = inlined_call_operand.hbm [shape: f32[8,33], index: 0, kind: input, shape index: {}]
  %s1 = inlined_call_operand.vmem [shape: f32[1,1,128], index: 1, kind: output, shape index: {}]
  %s2 = sld [smem:[#allocation0]]
  $region18: #{nce_criterion.1} parent=0
    _
  %s4 = ssub.s32 1, %s2
  %s5 = scalar_select 0, %s4, %s2
  $region1: #{nce_criterion.1} parent=0
    #allocation2 [shape = 'u8[4096]{0}', space=vmem, size = 0x1000, scoped, tag = 'input window, operand 0, single buffered']
    #allocation3 [shape = 's32[1]{0}', space=sflag, size = 0x4, scoped, tag = 'scoped memory for nce_criterion.1']
    %6 = vsyncpa [#allocation3], 0
    // Predicated region
    $region2: #{nce_criterion.1} parent=1 // pred_check
      _
    $region3: #{nce_criterion.1} parent=1 // pred_check_branch
      %8 = sbr.rel (0) target = $region5
    $region4: #{nce_criterion.1} parent=1 // pred_region
      %10 = vsyncadd [#allocation3], 0
      %s12 = sshll.u32 %s0, 4
      %s13 = int_to_ptr.hbm [resolvable:$true] %s12
      %s14 = sshll.u32 [#allocation2], 4
      %s15 = int_to_ptr.vmem [resolvable:$true] %s14
      %17 = dma.hbm_to_vmem [thread:$0]  %s13, 128, %s15, [#allocation3]
    $region5: #{nce_criterion.1} parent=1 // pred_fallthru
      _
    // Predicated region
    $region6: #{nce_criterion.1} parent=1 // pred_check
      _
    $region7: #{nce_criterion.1} parent=1 // pred_check_branch
      %19 = sbr.rel (0) target = $region9
    $region8: #{nce_criterion.1} parent=1 // pred_region
      %21 = dma.done [#allocation3], 128
    $region9: #{nce_criterion.1} parent=1 // pred_fallthru
      _
    %v22 = vld [vmem:[#allocation2] sm:$0xff]
    %v23 = vadd.f32 %v22, 0.03200012
    %v24 = vlog2.pop %v23
    %v25 = vmul.f32 %v24, 0.6931472
    %v26 = vsub.f32 -3.4420195, %v25
    %v27 = vlog2.pop %v22
    %v28 = vmul.f32 %v27, 0.6931472
    %v29 = vsub.f32 %v28, -3.4420195
    %vm30 = vcmask 269312
    %v31 = vsel %vm30, %v26, 0.0
    %32 = vadd.xlane.f32.xlu0 %v31
    %v33 = vpop.xlane.xlu0 %32
    %v34 = vrot.slane %v33, 4
    %v35 = vadd.f32 %v33, %v34
    %v36 = vrot.slane %v35, 2
    %v37 = vadd.f32 %v35, %v36
    %v38 = vrot.slane %v37, 1
    %v39 = vadd.f32 %v37, %v38
    %s40 = vtos %v39
    %vm41 = vcmask 7168
    %v42 = vsel %vm41, %v29, 0.0
    %43 = vadd.xlane.f32.xlu0 %v42
    %v44 = vpop.xlane.xlu0 %43
    %v45 = vrot.slane %v44, 4
    %v46 = vadd.f32 %v44, %v45
    %v47 = vrot.slane %v46, 2
    %v48 = vadd.f32 %v46, %v47
    %v49 = vrot.slane %v48, 1
    %v50 = vadd.f32 %v48, %v49
    %s51 = vtos %v50
    %s52 = sadd.f32 %s40, %s51
    %v53 = vstv %s52
    %54 = vst [vmem:[%s1] sm:$0x1] %v53
    // Predicated region
    $region10: #{nce_criterion.1} parent=1 // pred_check
      _
    $region11: #{nce_criterion.1} parent=1 // pred_check_branch
      %56 = sbr.rel (0) target = $region13
    $region12: #{nce_criterion.1} parent=1 // pred_region
      _
    $region13: #{nce_criterion.1} parent=1 // pred_fallthru
      _
    // Predicated region
    $region14: #{nce_criterion.1} parent=1 // pred_check
      _
    $region15: #{nce_criterion.1} parent=1 // pred_check_branch
      %58 = sbr.rel (0) target = $region17
    $region16: #{nce_criterion.1} parent=1 // pred_region
      _
    $region17: #{nce_criterion.1} parent=1 // pred_fallthru
      _
    %59 = vsyncpa [#allocation3], 1

</llo_original>
